<compile_context>
chip_gen: v5e
topology: v5e:2x2
jax: 0.10.0
libtpu: 0.0.40
codegen_flags: <defaults>
</compile_context>

<pallas_src>
import functools
import math
from typing import NamedTuple

import jax
import jax.numpy as jnp
from jax import lax
from jax.experimental import pallas as pl
from jax.experimental.pallas import tpu as pltpu


def _round_up(x: int, m: int) -> int:
    return ((x + m - 1) // m) * m


# --------------------------------------------------------------------------
# One-time weight preprocessing (hoist out of the per-call hot path).
# --------------------------------------------------------------------------
class PreparedWeights(NamedTuple):
    w_qkv: jax.Array        # (din_pad, 3*d_pad); W_q pre-scaled by 1/sqrt(d_out)
    d_in: int
    d_out: int
    din_pad: int
    d_pad: int
    compute_dtype: jnp.dtype


def prepare_weights(w_q, w_k, w_v, *, compute_dtype=jnp.bfloat16):
    d_in, d_out = w_q.shape
    din_pad = _round_up(d_in, 128)
    d_pad = _round_up(d_out, 128)
    scale = 1.0 / math.sqrt(d_out)   # folded into W_q (== torch's /sqrt(d_out))

    def _pad(w):
        w = w.astype(compute_dtype)
        if (d_in, d_out) != (din_pad, d_pad):
            w = jnp.zeros((din_pad, d_pad), compute_dtype).at[:d_in, :d_out].set(w)
        return w

    w_qkv = jnp.concatenate([_pad(w_q * scale), _pad(w_k), _pad(w_v)], axis=1)
    return PreparedWeights(w_qkv, d_in, d_out, din_pad, d_pad, compute_dtype)


# --------------------------------------------------------------------------
# Stage 1: fused QKV projection (runs ONCE; K/V not recomputed per q-tile).
# --------------------------------------------------------------------------
def _qkv_proj_kernel(x_ref, w_ref, q_ref, k_ref, v_ref, *, d_pad):
    # x_ref: (tq, din_pad)   w_ref: (din_pad, 3*d_pad)   outputs: (tq, d_pad) each
    qkv = jnp.dot(x_ref[...], w_ref[...], preferred_element_type=jnp.float32)
    q_ref[...] = qkv[:, :d_pad].astype(q_ref.dtype)
    k_ref[...] = qkv[:, d_pad:2 * d_pad].astype(k_ref.dtype)
    v_ref[...] = qkv[:, 2 * d_pad:].astype(v_ref.dtype)


# --------------------------------------------------------------------------
# Stage 2: flash attention, online softmax over the "arbitrary" KV axis.
# --------------------------------------------------------------------------
def _flash_attn_kernel(q_ref, k_ref, v_ref, o_ref, m_sc, l_sc, acc_sc, *,
                       seq, tk, mask_padded_keys):
    j = pl.program_id(1)

    @pl.when(j == 0)
    def _init():
        m_sc[...] = jnp.full_like(m_sc, -jnp.inf)
        l_sc[...] = jnp.zeros_like(l_sc)
        acc_sc[...] = jnp.zeros_like(acc_sc)

    # scores = q @ k^T (scale already folded into W_q): contract minor dims so
    # no (tk, d) transpose is materialized in VMEM.
    s = lax.dot_general(q_ref[...], k_ref[...], (((1,), (1,)), ((), ())),
                        preferred_element_type=jnp.float32)

    if mask_padded_keys:
        # Zero-padded key rows must not receive attention weight.
        key_idx = j * tk + lax.broadcasted_iota(jnp.int32, s.shape, 1)
        s = jnp.where(key_idx < seq, s, -jnp.inf)

    # Online softmax update (all elementwise math in f32 on all TPU gens).
    m_prev = m_sc[...]
    m_new = jnp.maximum(m_prev, jnp.max(s, axis=-1, keepdims=True))
    alpha = jnp.exp(m_prev - m_new)
    p = jnp.exp(s - m_new)
    l_sc[...] = alpha * l_sc[...] + jnp.sum(p, axis=-1, keepdims=True)
    acc_sc[...] = alpha * acc_sc[...] + jnp.dot(
        p.astype(v_ref.dtype), v_ref[...], preferred_element_type=jnp.float32)
    m_sc[...] = m_new

    @pl.when(j == pl.num_programs(1) - 1)
    def _finalize():
        # pl.reciprocal(approx=True): EUP slot, ~2^-12 rel error; set
        # approx=False if bit-level parity with torch.softmax is required.
        o_ref[...] = (acc_sc[...] *
                      pl.reciprocal(l_sc[...], approx=True)).astype(o_ref.dtype)


# --------------------------------------------------------------------------
# VMEM budget computed from the actual tile footprint (+ headroom), capped
# below the v7x 64 MiB/TC physical size.
# --------------------------------------------------------------------------
def _vmem_limit_bytes(tq, tk, d_pad, din_pad, cd_bytes, out_bytes, kv_buffers):
    dbl = 2
    kvb = max(2, kv_buffers)
    proj = (dbl * tq * din_pad * cd_bytes            # x row-tile stream
            + dbl * din_pad * 3 * d_pad * cd_bytes   # fused W (resident)
            + dbl * 3 * tq * d_pad * cd_bytes        # q/k/v output streams
            + tq * 3 * d_pad * 4)                    # f32 matmul result temp
    attn = (dbl * tq * d_pad * cd_bytes              # q tile
            + kvb * 2 * tk * d_pad * cd_bytes        # k + v tiles
            + dbl * tq * d_pad * out_bytes           # output tile
            + tq * d_pad * 4 + 2 * tq * 128 * 4      # acc + m/l scratch
            + 4 * tq * tk * 4)                       # score / exp temporaries
    est = max(proj, attn)
    return int(min(max(2 * est + (8 << 20), 32 << 20), 56 << 20))


# --------------------------------------------------------------------------
# Hot-path forward with prepared weights.
# --------------------------------------------------------------------------
def self_attention_fwd(x, params: PreparedWeights, *, tq=256, tk=512,
                       kv_buffers=2):
    seq, d_in = x.shape
    assert d_in == params.d_in, (d_in, params.d_in)
    out_dtype = x.dtype
    cd = params.compute_dtype
    din_pad, d_pad, d_out = params.din_pad, params.d_pad, params.d_out

    # Tile sizes: (8,128)-aligned, clamped for short sequences; seq_pad is a
    # multiple of both tq and tk.
    tq = _round_up(min(tq, _round_up(seq, 8)), 8)
    seq_pad = _round_up(seq, tq)
    if seq_pad % tk != 0:
        tk = tq
    n_q = seq_pad // tq
    n_kv = seq_pad // tk
    mask_padded_keys = seq_pad != seq

    # Pad/cast x only when needed (no hot-path copy for aligned inputs).
    if (seq, d_in) == (seq_pad, din_pad):
        x_p = x.astype(cd)
    else:
        x_p = jnp.zeros((seq_pad, din_pad), cd).at[:seq, :d_in].set(x.astype(cd))

    vmem_limit = _vmem_limit_bytes(tq, tk, d_pad, din_pad,
                                   jnp.dtype(cd).itemsize,
                                   jnp.dtype(out_dtype).itemsize, kv_buffers)

    # ---- Stage 1: QKV projection (one pass over x; seq tiles run in parallel).
    q, k, v = pl.pallas_call(
        functools.partial(_qkv_proj_kernel, d_pad=d_pad),
        out_shape=tuple(jax.ShapeDtypeStruct((seq_pad, d_pad), cd)
                        for _ in range(3)),
        grid_spec=pltpu.PrefetchScalarGridSpec(
            num_scalar_prefetch=0,
            grid=(n_q,),
            in_specs=[
                pl.BlockSpec((tq, din_pad), lambda i: (i, 0)),
                pl.BlockSpec((din_pad, 3 * d_pad), lambda i: (0, 0)),
            ],
            out_specs=[pl.BlockSpec((tq, d_pad), lambda i: (i, 0))
                       for _ in range(3)],
        ),
        compiler_params=pltpu.CompilerParams(
            dimension_semantics=("parallel",),
            vmem_limit_bytes=vmem_limit,
        ),
    )(x_p, params.w_qkv)

    # ---- Stage 2: flash attention over (q-tiles parallel, kv-tiles arbitrary).
    kv_kwargs = {}
    if kv_buffers > 2 and n_kv >= kv_buffers:
        kv_kwargs = dict(pipeline_mode=pl.Buffered(kv_buffers))

    out = pl.pallas_call(
        functools.partial(_flash_attn_kernel, seq=seq, tk=tk,
                          mask_padded_keys=mask_padded_keys),
        out_shape=jax.ShapeDtypeStruct((seq_pad, d_pad), out_dtype),
        grid_spec=pltpu.PrefetchScalarGridSpec(
            num_scalar_prefetch=0,
            grid=(n_q, n_kv),
            in_specs=[
                pl.BlockSpec((tq, d_pad), lambda i, j: (i, 0)),
                pl.BlockSpec((tk, d_pad), lambda i, j: (j, 0), **kv_kwargs),
                pl.BlockSpec((tk, d_pad), lambda i, j: (j, 0), **kv_kwargs),
            ],
            out_specs=pl.BlockSpec((tq, d_pad), lambda i, j: (i, 0)),
            scratch_shapes=[
                pltpu.VMEM((tq, 1), jnp.float32),      # running max m
                pltpu.VMEM((tq, 1), jnp.float32),      # running denom l
                pltpu.VMEM((tq, d_pad), jnp.float32),  # accumulator
            ],
        ),
        compiler_params=pltpu.CompilerParams(
            dimension_semantics=("parallel", "arbitrary"),
            vmem_limit_bytes=vmem_limit,
        ),
    )(q, k, v)

    return out[:seq, :d_out]


def self_attention_v1(x, w_q, w_k, w_v, *, tq=256, tk=512,
                      compute_dtype=jnp.bfloat16, kv_buffers=2):
    """softmax((xWq)(xWk)^T / sqrt(d_out)) @ (xWv) -- SelfAttention_v1.forward."""
    params = prepare_weights(w_q, w_k, w_v, compute_dtype=compute_dtype)
    return self_attention_fwd(x, params, tq=tq, tk=tk, kv_buffers=kv_buffers)


# --------------------------------------------------------------------------
# Reference + tests
# --------------------------------------------------------------------------
def _reference(x, w_q, w_k, w_v):
    q = x @ w_q
    k = x @ w_k
    v = x @ w_v
    s = (q @ k.T) / jnp.sqrt(jnp.float32(k.shape[-1]))
    return jax.nn.softmax(s, axis=-1) @ v


if __name__ == "__main__":
    # Toy shapes implied by the module: x (seq, d_in), W_* (d_in, d_out).
    seq, d_in, d_out = 8, 32, 16

    key = jax.random.PRNGKey(0)
    kx, kq, kk, kv = jax.random.split(key, 4)
    x = jax.random.normal(kx, (seq, d_in), dtype=jnp.float32)
    W_q = jax.random.normal(kq, (d_in, d_out), dtype=jnp.float32)
    W_k = jax.random.normal(kk, (d_in, d_out), dtype=jnp.float32)
    W_v = jax.random.normal(kv, (d_in, d_out), dtype=jnp.float32)

    # 1) f32 MXU operands at the module's toy shape: tight parity check.
    out = jax.block_until_ready(
        self_attention_v1(x, W_q, W_k, W_v, compute_dtype=jnp.float32))
    ref = _reference(x, W_q, W_k, W_v)
    assert out.shape == (seq, d_out)
    assert jnp.allclose(out, ref, atol=2e-3, rtol=5e-3), \
        float(jnp.max(jnp.abs(out - ref)))

    # 2) Multi-tile path with seq padding / key masking (seq=300 -> 2 q-tiles,
    #    1 kv-tile of 512), still f32 operands for a tight check.
    seq2 = 300
    x2 = jax.random.normal(kx, (seq2, d_in), dtype=jnp.float32) * 0.25
    out2 = jax.block_until_ready(
        self_attention_v1(x2, W_q, W_k, W_v, compute_dtype=jnp.float32))
    ref2 = _reference(x2, W_q, W_k, W_v)
    assert out2.shape == (seq2, d_out)
    assert jnp.allclose(out2, ref2, atol=2e-3, rtol=5e-3), \
        float(jnp.max(jnp.abs(out2 - ref2)))

    # 3) Default bf16 MXU operands (f32 accumulate + f32 softmax): documented
    #    precision deviation, so compare with a looser tolerance.
    out3 = jax.block_until_ready(self_attention_v1(x2, W_q, W_k, W_v))
    assert out3.shape == (seq2, d_out)
    assert jnp.allclose(out3, ref2, atol=5e-2, rtol=5e-2), \
        float(jnp.max(jnp.abs(out3 - ref2)))

    print("KERNEL_OK")
</pallas_src>

<mosaic_0001>
module attributes {stable_mosaic.version = 11 : i64} {
  func.func @_qkv_proj_kernel(%arg0: i32, %arg1: memref<8x128xf32, #tpu.memory_space<vmem>>, %arg2: memref<128x384xf32, #tpu.memory_space<vmem>>, %arg3: memref<8x128xf32, #tpu.memory_space<vmem>>, %arg4: memref<8x128xf32, #tpu.memory_space<vmem>>, %arg5: memref<8x128xf32, #tpu.memory_space<vmem>>) attributes {dimension_semantics = [#tpu.dimension_semantics<parallel>], iteration_bounds = array<i64: 1>, scalar_prefetch = 0 : i64, scratch_operands = 0 : i64, tpu.core_type = #tpu.core_type<tc>, window_params = [{transform_indices = @transform_0, window_bounds = array<i64: 8, 128>}, {pipeline_mode = #tpu.pipeline_mode<synchronous>, transform_indices = @transform_1, window_bounds = array<i64: 128, 384>}, {transform_indices = @transform_2, window_bounds = array<i64: 8, 128>}, {transform_indices = @transform_3, window_bounds = array<i64: 8, 128>}, {transform_indices = @transform_4, window_bounds = array<i64: 8, 128>}]} {
    %c0 = arith.constant 0 : index
    %c0_0 = arith.constant 0 : index
    %0 = vector.load %arg1[%c0, %c0_0] : memref<8x128xf32, #tpu.memory_space<vmem>>, vector<8x128xf32>
    %c0_1 = arith.constant 0 : index
    %c0_2 = arith.constant 0 : index
    %1 = vector.load %arg2[%c0_1, %c0_2] : memref<128x384xf32, #tpu.memory_space<vmem>>, vector<128x384xf32>
    %cst = arith.constant dense<0.000000e+00> : vector<8x384xf32>
    %2 = tpu.matmul %0, %1, %cst {dimension_numbers = #tpu.dot_dimension_numbers<[1], [0], [0], [1], [0, 0, 1, 1], [], []>} : vector<8x128xf32>, vector<128x384xf32>, vector<8x384xf32> -> vector<8x384xf32>
    %3 = vector.extract_strided_slice %2 {offsets = [0, 0], sizes = [8, 128], strides = [1, 1]} : vector<8x384xf32> to vector<8x128xf32>
    %c0_3 = arith.constant 0 : index
    %c0_4 = arith.constant 0 : index
    %4 = vector.load %arg3[%c0_3, %c0_4] : memref<8x128xf32, #tpu.memory_space<vmem>>, vector<8x128xf32>
    tpu.vector_store %arg3[%c0_3, %c0_4], %3 {strides = array<i32>} : memref<8x128xf32, #tpu.memory_space<vmem>>, vector<8x128xf32>,
    %5 = vector.extract_strided_slice %2 {offsets = [0, 128], sizes = [8, 128], strides = [1, 1]} : vector<8x384xf32> to vector<8x128xf32>
    %c0_5 = arith.constant 0 : index
    %c0_6 = arith.constant 0 : index
    %6 = vector.load %arg4[%c0_5, %c0_6] : memref<8x128xf32, #tpu.memory_space<vmem>>, vector<8x128xf32>
    tpu.vector_store %arg4[%c0_5, %c0_6], %5 {strides = array<i32>} : memref<8x128xf32, #tpu.memory_space<vmem>>, vector<8x128xf32>,
    %7 = vector.extract_strided_slice %2 {offsets = [0, 256], sizes = [8, 128], strides = [1, 1]} : vector<8x384xf32> to vector<8x128xf32>
    %c0_7 = arith.constant 0 : index
    %c0_8 = arith.constant 0 : index
    %8 = vector.load %arg5[%c0_7, %c0_8] : memref<8x128xf32, #tpu.memory_space<vmem>>, vector<8x128xf32>
    tpu.vector_store %arg5[%c0_7, %c0_8], %7 {strides = array<i32>} : memref<8x128xf32, #tpu.memory_space<vmem>>, vector<8x128xf32>,
    return
  }
  func.func @transform_0(%arg0: i32) -> (i32, i32) {
    %c0_i32 = arith.constant 0 : i32
    %c0_i32_0 = arith.constant 0 : i32
    return %arg0, %c0_i32 : i32, i32
  }
  func.func @transform_1(%arg0: i32) -> (i32, i32) {
    %c0_i32 = arith.constant 0 : i32
    %c0_i32_0 = arith.constant 0 : i32
    %c0_i32_1 = arith.constant 0 : i32
    return %c0_i32, %c0_i32_0 : i32, i32
  }
  func.func @transform_2(%arg0: i32) -> (i32, i32) {
    %c0_i32 = arith.constant 0 : i32
    %c0_i32_0 = arith.constant 0 : i32
    return %arg0, %c0_i32 : i32, i32
  }
  func.func @transform_3(%arg0: i32) -> (i32, i32) {
    %c0_i32 = arith.constant 0 : i32
    %c0_i32_0 = arith.constant 0 : i32
    return %arg0, %c0_i32 : i32, i32
  }
  func.func @transform_4(%arg0: i32) -> (i32, i32) {
    %c0_i32 = arith.constant 0 : i32
    %c0_i32_0 = arith.constant 0 : i32
    return %arg0, %c0_i32 : i32, i32
  }
}

</mosaic_0001>

<llo_original>
// kernel: tpu_custom_call.1
$region0: #{tpu_custom_call.1}
  #allocation0 [shape = 'u32[]', space=smem, size = 0x4, offset = 0x4, fixed_abs, tag = 'smem constant byte address 0x4 - core index']
  #allocation1 [shape = 'u32[72,128]{1,0:T(1,128)}', space=vmem, size = 0x9000, scoped, tag = 'internal scratch']
  %s0 = inlined_call_operand.hbm [shape: f32[8,128], index: 0, kind: input, shape index: {}]
  %s1 = inlined_call_operand.hbm [shape: f32[128,384], index: 1, kind: input, shape index: {}]
  %s2 = inlined_call_operand.hbm [shape: f32[8,128], index: 2, kind: output, shape index: {0}]
  %s3 = inlined_call_operand.hbm [shape: f32[8,128], index: 3, kind: output, shape index: {1}]
  %s4 = inlined_call_operand.hbm [shape: f32[8,128], index: 4, kind: output, shape index: {2}]
  %5 = xla_tuple %s2, %s3, %s4
  %s6 = sld [smem:[#allocation0]]
  $region42: #{tpu_custom_call.1} parent=0
    _
  %s8 = ssub.s32 1, %s6
  %s9 = scalar_select 0, %s8, %s6
  $region1: #{tpu_custom_call.1} parent=0
    #allocation2 [shape = 'u8[4096]{0}', space=vmem, size = 0x1000, scoped, tag = 'input window, operand 0, single buffered']
    #allocation3 [shape = 's32[1]{0}', space=sflag, size = 0x4, scoped, tag = 'scoped memory for tpu_custom_call.1']
    #allocation4 [shape = 's32[1]{0}', space=sflag, size = 0x4, scoped, tag = 'scoped memory for tpu_custom_call.1']
    #allocation5 [shape = 'u8[196608]{0}', space=vmem, size = 0x30000, scoped, tag = 'input window, operand 1, single buffered']
    #allocation6 [shape = 's32[1]{0}', space=sflag, size = 0x4, scoped, tag = 'scoped memory for tpu_custom_call.1']
    #allocation7 [shape = 'u8[4096]{0}', space=vmem, size = 0x1000, scoped, tag = 'output window, operand 0, single buffered']
    #allocation8 [shape = 'u8[4096]{0}', space=vmem, size = 0x1000, scoped, tag = 'output window, operand 1, single buffered']
    #allocation9 [shape = 's32[1]{0}', space=sflag, size = 0x4, scoped, tag = 'scoped memory for tpu_custom_call.1']
    #allocation10 [shape = 'u8[4096]{0}', space=vmem, size = 0x1000, scoped, tag = 'output window, operand 2, single buffered']
    %10 = vsyncpa [#allocation3], 0
    %11 = vsyncpa [#allocation6], 0
    %12 = vsyncpa [#allocation4], 0
    %13 = vsyncpa [#allocation9], 0
    // Predicated region
    $region2: #{tpu_custom_call.1} parent=1 // pred_check
      _
    $region3: #{tpu_custom_call.1} parent=1 // pred_check_branch
      %15 = sbr.rel (0) target = $region5
    $region4: #{tpu_custom_call.1} parent=1 // pred_region
      %17 = vsyncadd [#allocation3], 0
      %s19 = sshll.u32 %s0, 4
      %s20 = int_to_ptr.hbm [resolvable:$true] %s19
      %s21 = sshll.u32 [#allocation2], 4
      %s22 = int_to_ptr.vmem [resolvable:$true] %s21
      %24 = dma.hbm_to_vmem [thread:$0]  %s20, 128, %s22, [#allocation3]
    $region5: #{tpu_custom_call.1} parent=1 // pred_fallthru
      _
    // Predicated region
    $region6: #{tpu_custom_call.1} parent=1 // pred_check
      _
    $region7: #{tpu_custom_call.1} parent=1 // pred_check_branch
      %26 = sbr.rel (0) target = $region9
    $region8: #{tpu_custom_call.1} parent=1 // pred_region
      %28 = vsyncadd [#allocation6], 0
      %s29 = sshll.u32 %s1, 4
      %s30 = int_to_ptr.hbm [resolvable:$true] %s29
      %s31 = sshll.u32 [#allocation5], 4
      %s32 = int_to_ptr.vmem [resolvable:$true] %s31
      %37 = dma.hbm_to_vmem [thread:$0]  %s30, 6144, %s32, [#allocation6], 384, 384, 24
    $region9: #{tpu_custom_call.1} parent=1 // pred_fallthru
      _
    // Predicated region
    $region10: #{tpu_custom_call.1} parent=1 // pred_check
      _
    $region11: #{tpu_custom_call.1} parent=1 // pred_check_branch
      %39 = sbr.rel (0) target = $region13
    $region12: #{tpu_custom_call.1} parent=1 // pred_region
      %41 = dma.done [#allocation3], 128
    $region13: #{tpu_custom_call.1} parent=1 // pred_fallthru
      _
    // Predicated region
    $region14: #{tpu_custom_call.1} parent=1 // pred_check
      _
    $region15: #{tpu_custom_call.1} parent=1 // pred_check_branch
      %43 = sbr.rel (0) target = $region17
    $region16: #{tpu_custom_call.1} parent=1 // pred_region
      %45 = dma.done [#allocation6], 6144
    $region17: #{tpu_custom_call.1} parent=1 // pred_fallthru
      _
    %v46 = vld [vmem:[#allocation2] sm:$0xff]
    %v47 = vld [vmem:[#allocation5] sm:$0xff]
    %v48 = vld [vmem:[#allocation5 + $0x8] sm:$0xff]
    %v49 = vld [vmem:[#allocation5 + $0x10] sm:$0xff]
    %v50 = vld [vmem:[#allocation5 + $0x18] sm:$0xff]
    %v51 = vld [vmem:[#allocation5 + $0x20] sm:$0xff]
    %v52 = vld [vmem:[#allocation5 + $0x28] sm:$0xff]
    %v53 = vld [vmem:[#allocation5 + $0x30] sm:$0xff]
    %v54 = vld [vmem:[#allocation5 + $0x38] sm:$0xff]
    %v55 = vld [vmem:[#allocation5 + $0x40] sm:$0xff]
    %v56 = vld [vmem:[#allocation5 + $0x48] sm:$0xff]
    %v57 = vld [vmem:[#allocation5 + $0x50] sm:$0xff]
    %v58 = vld [vmem:[#allocation5 + $0x58] sm:$0xff]
    %v59 = vld [vmem:[#allocation5 + $0x60] sm:$0xff]
    %v60 = vld [vmem:[#allocation5 + $0x68] sm:$0xff]
    %v61 = vld [vmem:[#allocation5 + $0x70] sm:$0xff]
    %v62 = vld [vmem:[#allocation5 + $0x78] sm:$0xff]
    %v63 = vld [vmem:[#allocation5 + $0x80] sm:$0xff]
    %v64 = vld [vmem:[#allocation5 + $0x88] sm:$0xff]
    %v65 = vld [vmem:[#allocation5 + $0x90] sm:$0xff]
    %v66 = vld [vmem:[#allocation5 + $0x98] sm:$0xff]
    %v67 = vld [vmem:[#allocation5 + $0xa0] sm:$0xff]
    %v68 = vld [vmem:[#allocation5 + $0xa8] sm:$0xff]
    %v69 = vld [vmem:[#allocation5 + $0xb0] sm:$0xff]
    %v70 = vld [vmem:[#allocation5 + $0xb8] sm:$0xff]
    %v71 = vld [vmem:[#allocation5 + $0xc0] sm:$0xff]
    %v72 = vld [vmem:[#allocation5 + $0xc8] sm:$0xff]
    %v73 = vld [vmem:[#allocation5 + $0xd0] sm:$0xff]
    %v74 = vld [vmem:[#allocation5 + $0xd8] sm:$0xff]
    %v75 = vld [vmem:[#allocation5 + $0xe0] sm:$0xff]
    %v76 = vld [vmem:[#allocation5 + $0xe8] sm:$0xff]
    %v77 = vld [vmem:[#allocation5 + $0xf0] sm:$0xff]
    %v78 = vld [vmem:[#allocation5 + $0xf8] sm:$0xff]
    %v79 = vld [vmem:[#allocation5 + $0x100] sm:$0xff]
    %v80 = vld [vmem:[#allocation5 + $0x108] sm:$0xff]
    %v81 = vld [vmem:[#allocation5 + $0x110] sm:$0xff]
    %v82 = vld [vmem:[#allocation5 + $0x118] sm:$0xff]
    %v83 = vld [vmem:[#allocation5 + $0x120] sm:$0xff]
    %v84 = vld [vmem:[#allocation5 + $0x128] sm:$0xff]
    %v85 = vld [vmem:[#allocation5 + $0x130] sm:$0xff]
    %v86 = vld [vmem:[#allocation5 + $0x138] sm:$0xff]
    %v87 = vld [vmem:[#allocation5 + $0x140] sm:$0xff]
    %v88 = vld [vmem:[#allocation5 + $0x148] sm:$0xff]
    %v89 = vld [vmem:[#allocation5 + $0x150] sm:$0xff]
    %v90 = vld [vmem:[#allocation5 + $0x158] sm:$0xff]
    %v91 = vld [vmem:[#allocation5 + $0x160] sm:$0xff]
    %v92 = vld [vmem:[#allocation5 + $0x168] sm:$0xff]
    %v93 = vld [vmem:[#allocation5 + $0x170] sm:$0xff]
    %v94 = vld [vmem:[#allocation5 + $0x178] sm:$0xff]
    %95 = vmatpush.msra.mxu0 %v92
    %96 = vmatpush.msra.mxu0 %v89
    %97 = vmatpush.msra.mxu0 %v86
    %98 = vmatpush.msra.mxu0 %v83
    %99 = vmatpush.msra.mxu0 %v80
    %100 = vmatpush.msra.mxu0 %v77
    %101 = vmatpush.msra.mxu0 %v74
    %102 = vmatpush.msra.mxu0 %v71
    %103 = vmatpush.msra.mxu0 %v68
    %104 = vmatpush.msra.mxu0 %v65
    %105 = vmatpush.msra.mxu0 %v62
    %106 = vmatpush.msra.mxu0 %v59
    %107 = vmatpush.msra.mxu0 %v56
    %108 = vmatpush.msra.mxu0 %v53
    %109 = vmatpush.msra.mxu0 %v50
    %110 = vmatpush.msra.mxu0 %v47
    %111 = vmatmul.f32.gmra.mxu0 %v46
    %v112 = vpop.f32.mrf.mxu0
    %v113 = vadd.f32 0.0, %v112
    %114 = vdwg.mxu0
    %115 = vmatpush.msra.mxu0 %v93
    %116 = vmatpush.msra.mxu0 %v90
    %117 = vmatpush.msra.mxu0 %v87
    %118 = vmatpush.msra.mxu0 %v84
    %119 = vmatpush.msra.mxu0 %v81
    %120 = vmatpush.msra.mxu0 %v78
    %121 = vmatpush.msra.mxu0 %v75
    %122 = vmatpush.msra.mxu0 %v72
    %123 = vmatpush.msra.mxu0 %v69
    %124 = vmatpush.msra.mxu0 %v66
    %125 = vmatpush.msra.mxu0 %v63
    %126 = vmatpush.msra.mxu0 %v60
    %127 = vmatpush.msra.mxu0 %v57
    %128 = vmatpush.msra.mxu0 %v54
    %129 = vmatpush.msra.mxu0 %v51
    %130 = vmatpush.msra.mxu0 %v48
    %131 = vmatmul.f32.gmra.mxu0 %v46
    %v132 = vpop.f32.mrf.mxu0
    %v133 = vadd.f32 0.0, %v132
    %134 = vdwg.mxu0
    %135 = vmatpush.msra.mxu0 %v94
    %136 = vmatpush.msra.mxu0 %v91
    %137 = vmatpush.msra.mxu0 %v88
    %138 = vmatpush.msra.mxu0 %v85
    %139 = vmatpush.msra.mxu0 %v82
    %140 = vmatpush.msra.mxu0 %v79
    %141 = vmatpush.msra.mxu0 %v76
    %142 = vmatpush.msra.mxu0 %v73
    %143 = vmatpush.msra.mxu0 %v70
    %144 = vmatpush.msra.mxu0 %v67
    %145 = vmatpush.msra.mxu0 %v64
    %146 = vmatpush.msra.mxu0 %v61
    %147 = vmatpush.msra.mxu0 %v58
    %148 = vmatpush.msra.mxu0 %v55
    %149 = vmatpush.msra.mxu0 %v52
    %150 = vmatpush.msra.mxu0 %v49
    %151 = vmatmul.f32.gmra.mxu0 %v46
    %v152 = vpop.f32.mrf.mxu0
    %v153 = vadd.f32 0.0, %v152
    %154 = vdwg.mxu0
    %155 = vst [vmem:[#allocation7] sm:$0xff] %v113
    %156 = vst [vmem:[#allocation8] sm:$0xff] %v133
    %157 = vst [vmem:[#allocation10] sm:$0xff] %v153
    // Predicated region
    $region18: #{tpu_custom_call.1} parent=1 // pred_check
      _
    $region19: #{tpu_custom_call.1} parent=1 // pred_check_branch
      %159 = sbr.rel (0) target = $region21
    $region20: #{tpu_custom_call.1} parent=1 // pred_region
      %161 = vsyncadd [#allocation4], 0
      %s163 = sshll.u32 [#allocation7], 4
      %s164 = int_to_ptr.vmem [resolvable:$true] %s163
      %s165 = sshll.u32 %s2, 4
      %s166 = int_to_ptr.hbm [resolvable:$true] %s165
      %168 = dma.vmem_to_hbm [thread:$0]  %s164, 128, %s166, [#allocation4]
    $region21: #{tpu_custom_call.1} parent=1 // pred_fallthru
      _
    // Predicated region
    $region22: #{tpu_custom_call.1} parent=1 // pred_check
      _
    $region23: #{tpu_custom_call.1} parent=1 // pred_check_branch
      %170 = sbr.rel (0) target = $region25
    $region24: #{tpu_custom_call.1} parent=1 // pred_region
      %172 = vsyncadd [#allocation9], 0
      %s174 = sshll.u32 [#allocation8], 4
      %s175 = int_to_ptr.vmem [resolvable:$true] %s174
      %s176 = sshll.u32 %s3, 4
      %s177 = int_to_ptr.hbm [resolvable:$true] %s176
      %179 = dma.vmem_to_hbm [thread:$0]  %s175, 128, %s177, [#allocation9]
    $region25: #{tpu_custom_call.1} parent=1 // pred_fallthru
      _
    // Predicated region
    $region26: #{tpu_custom_call.1} parent=1 // pred_check
      _
    $region27: #{tpu_custom_call.1} parent=1 // pred_check_branch
      %181 = sbr.rel (0) target = $region29
    $region28: #{tpu_custom_call.1} parent=1 // pred_region
      %183 = vsyncadd [#allocation9], 0
      %s185 = sshll.u32 [#allocation10], 4
      %s186 = int_to_ptr.vmem [resolvable:$true] %s185
      %s187 = sshll.u32 %s4, 4
      %s188 = int_to_ptr.hbm [resolvable:$true] %s187
      %190 = dma.vmem_to_hbm [thread:$0]  %s186, 128, %s188, [#allocation9]
    $region29: #{tpu_custom_call.1} parent=1 // pred_fallthru
      _
    // Predicated region
    $region30: #{tpu_custom_call.1} parent=1 // pred_check
      _
    $region31: #{tpu_custom_call.1} parent=1 // pred_check_branch
      %192 = sbr.rel (0) target = $region33
    $region32: #{tpu_custom_call.1} parent=1 // pred_region
      %194 = dma.done [#allocation4], 128
    $region33: #{tpu_custom_call.1} parent=1 // pred_fallthru
      _
    // Predicated region
    $region34: #{tpu_custom_call.1} parent=1 // pred_check
      _
    $region35: #{tpu_custom_call.1} parent=1 // pred_check_branch
      %196 = sbr.rel (0) target = $region37
    $region36: #{tpu_custom_call.1} parent=1 // pred_region
      %198 = dma.done [#allocation9], 128
    $region37: #{tpu_custom_call.1} parent=1 // pred_fallthru
      _
    // Predicated region
    $region38: #{tpu_custom_call.1} parent=1 // pred_check
      _
    $region39: #{tpu_custom_call.1} parent=1 // pred_check_branch
      %200 = sbr.rel (0) target = $region41
    $region40: #{tpu_custom_call.1} parent=1 // pred_region
      %202 = dma.done [#allocation9], 128
    $region41: #{tpu_custom_call.1} parent=1 // pred_fallthru
      _
    %203 = vsyncpa [#allocation3], 1
    %204 = vsyncpa [#allocation6], 1
    %205 = vsyncpa [#allocation4], 1
    %206 = vsyncpa [#allocation9], 1

</llo_original>
